<compile_context>
chip_gen: v7x
topology: tpu7x:2x2x1
jax: 0.10.0
libtpu: 0.0.40
codegen_flags: <defaults>
</compile_context>

<pallas_src>
import jax
import jax.numpy as jnp
from jax.experimental import pallas as pl
from jax.experimental.pallas import tpu as pltpu

# ----------------------------- small config ---------------------------------
BATCH = 2
NUM_PATCHES = 7
SEQ = NUM_PATCHES + 1          # +1 for cls token -> 8 rows = one sublane group
EMB_DIM = 128                  # 128 lanes -> lane-dense, unmasked stores


# ------------------------------ kernel ---------------------------------------
def add_pos_kernel(x_ref, pos_ref, o_ref):
    # x_ref: (B, SEQ, D), pos_ref: (1, SEQ, D) -> broadcast add over batch.
    o_ref[...] = x_ref[...] + pos_ref[...]


# ------------------------------ wrapper ---------------------------------------
@jax.jit
def position_embs(x, pos_embedding):
    """out = x + pos_embedding  (dropout = identity at inference)."""
    B, N, D = x.shape
    return pl.pallas_call(
        add_pos_kernel,
        out_shape=jax.ShapeDtypeStruct((B, N, D), x.dtype),
        # No grid: single launch, whole tensors resident in VMEM.  A grid over
        # batch would only add per-step overhead at this size.
        in_specs=[
            pl.BlockSpec(memory_space=pltpu.MemorySpace.VMEM),   # x
            pl.BlockSpec(memory_space=pltpu.MemorySpace.VMEM),   # pos_embedding
        ],
        out_specs=pl.BlockSpec(memory_space=pltpu.MemorySpace.VMEM),
    )(x, pos_embedding)


# -------------------------------- main -----------------------------------------
if __name__ == "__main__":
    key = jax.random.PRNGKey(0)
    kx, kp = jax.random.split(key)

    # Inputs consistent with the module's forward: x is a token sequence
    # (batch, num_patches + 1, emb_dim); pos_embedding ~ N(0, 1) like torch.randn.
    x = jax.random.normal(kx, (BATCH, SEQ, EMB_DIM), jnp.float32)
    pos_embedding = jax.random.normal(kp, (1, SEQ, EMB_DIM), jnp.float32)

    out = position_embs(x, pos_embedding)
    out = jax.block_until_ready(out)

    assert out.shape == (BATCH, SEQ, EMB_DIM), out.shape
    ref = x + pos_embedding
    assert bool(jnp.all(jnp.isfinite(out)))
    assert bool(jnp.allclose(out, ref, atol=1e-6, rtol=1e-6))
    print("KERNEL_OK")
</pallas_src>

<mosaic_0001>
module attributes {stable_mosaic.version = 11 : i64} {
  func.func @add_pos_kernel(%arg0: memref<2x8x128xf32, #tpu.memory_space<vmem>>, %arg1: memref<1x8x128xf32, #tpu.memory_space<vmem>>, %arg2: memref<2x8x128xf32, #tpu.memory_space<vmem>>) attributes {dimension_semantics = [], scalar_prefetch = 0 : i64, scratch_operands = 0 : i64, tpu.core_type = #tpu.core_type<tc>} {
    %c0 = arith.constant 0 : index
    %c0_0 = arith.constant 0 : index
    %c0_1 = arith.constant 0 : index
    %0 = vector.load %arg0[%c0, %c0_0, %c0_1] : memref<2x8x128xf32, #tpu.memory_space<vmem>>, vector<2x8x128xf32>
    %c0_2 = arith.constant 0 : index
    %c0_3 = arith.constant 0 : index
    %c0_4 = arith.constant 0 : index
    %1 = vector.load %arg1[%c0_2, %c0_3, %c0_4] : memref<1x8x128xf32, #tpu.memory_space<vmem>>, vector<1x8x128xf32>
    %2 = vector.broadcast %1 : vector<1x8x128xf32> to vector<2x8x128xf32>
    %3 = arith.addf %0, %2 : vector<2x8x128xf32>
    %c0_5 = arith.constant 0 : index
    %c0_6 = arith.constant 0 : index
    %c0_7 = arith.constant 0 : index
    %4 = vector.load %arg2[%c0_5, %c0_6, %c0_7] : memref<2x8x128xf32, #tpu.memory_space<vmem>>, vector<2x8x128xf32>
    tpu.vector_store %arg2[%c0_5, %c0_6, %c0_7], %3 {strides = array<i32>} : memref<2x8x128xf32, #tpu.memory_space<vmem>>, vector<2x8x128xf32>,
    return
  }
}

</mosaic_0001>

<llo_original>
// kernel: position_embs.1
$region0: #{position_embs.1}
  #allocation0 [shape = 'u32[]', space=smem, size = 0x4, offset = 0x4, fixed_abs, tag = 'smem constant byte address 0x4 - core index']
  #allocation1 [shape = 'u32[144,128]{1,0:T(1,128)}', space=vmem, size = 0x12000, scoped, tag = 'internal scratch']
  %s0 = inlined_call_operand.hbm [shape: f32[2,8,128], index: 0, kind: input, shape index: {}]
  %s1 = inlined_call_operand.hbm [shape: f32[1,8,128], index: 1, kind: input, shape index: {}]
  %s2 = inlined_call_operand.hbm [shape: f32[2,8,128], index: 2, kind: output, shape index: {}]
  %s3 = sld [smem:[#allocation0]]
  $region26: #{position_embs.1} parent=0
    _
  %s5 = ssub.s32 1, %s3
  %s6 = scalar_select 0, %s5, %s3
  $region1: #{position_embs.1} parent=0
    #allocation2 [shape = 'u8[8192]{0}', space=vmem, size = 0x2000, scoped, tag = 'input window, operand 0, single buffered']
    #allocation3 [shape = 's32[1]{0}', space=sflag, size = 0x4, scoped, tag = 'scoped memory for position_embs.1']
    #allocation4 [shape = 's32[1]{0}', space=sflag, size = 0x4, scoped, tag = 'scoped memory for position_embs.1']
    #allocation5 [shape = 'u8[4096]{0}', space=vmem, size = 0x1000, scoped, tag = 'input window, operand 1, single buffered']
    #allocation6 [shape = 's32[1]{0}', space=sflag, size = 0x4, scoped, tag = 'scoped memory for position_embs.1']
    #allocation7 [shape = 'u8[8192]{0}', space=vmem, size = 0x2000, scoped, tag = 'output window, operand 0, single buffered']
    %7 = vsyncpa [#allocation3], 0
    %8 = vsyncpa [#allocation6], 0
    %9 = vsyncpa [#allocation4], 0
    // Predicated region
    $region2: #{position_embs.1} parent=1 // pred_check
      _
    $region3: #{position_embs.1} parent=1 // pred_check_branch
      %11 = sbr.rel (0) target = $region5
    $region4: #{position_embs.1} parent=1 // pred_region
      %s13 = ssub.s32 256, 256
      %14 = vsyncadd [#allocation3], %s13
      %s15 = sshll.u32 [#allocation2], 4
      %s16 = int_to_ptr.vmem [resolvable:$true] %s15
      %21 = dma.hbm_to_vmem [thread:$0]  %s0, 256, %s16, [#allocation3], 128, 128, 8
    $region5: #{position_embs.1} parent=1 // pred_fallthru
      _
    // Predicated region
    $region6: #{position_embs.1} parent=1 // pred_check
      _
    $region7: #{position_embs.1} parent=1 // pred_check_branch
      %23 = sbr.rel (0) target = $region9
    $region8: #{position_embs.1} parent=1 // pred_region
      %s25 = ssub.s32 128, 128
      %26 = vsyncadd [#allocation6], %s25
      %s28 = sshll.u32 [#allocation5], 4
      %s29 = int_to_ptr.vmem [resolvable:$true] %s28
      %31 = dma.hbm_to_vmem [thread:$0]  %s1, 128, %s29, [#allocation6]
    $region9: #{position_embs.1} parent=1 // pred_fallthru
      _
    // Predicated region
    $region10: #{position_embs.1} parent=1 // pred_check
      _
    $region11: #{position_embs.1} parent=1 // pred_check_branch
      %33 = sbr.rel (0) target = $region13
    $region12: #{position_embs.1} parent=1 // pred_region
      %34 = dma.done [#allocation3], 256
    $region13: #{position_embs.1} parent=1 // pred_fallthru
      _
    // Predicated region
    $region14: #{position_embs.1} parent=1 // pred_check
      _
    $region15: #{position_embs.1} parent=1 // pred_check_branch
      %36 = sbr.rel (0) target = $region17
    $region16: #{position_embs.1} parent=1 // pred_region
      %37 = dma.done [#allocation6], 128
    $region17: #{position_embs.1} parent=1 // pred_fallthru
      _
    %v38 = vld [vmem:[#allocation2] sm:$0xff]
    %v39 = vld [vmem:[#allocation2 + $0x8] sm:$0xff]
    %v40 = vld [vmem:[#allocation5] sm:$0xff]
    %v41 = vadd.f32 %v38, %v40
    %v42 = vadd.f32 %v39, %v40
    %43 = vst [vmem:[#allocation7] sm:$0xff] %v41
    %44 = vst [vmem:[#allocation7 + $0x8] sm:$0xff] %v42
    // Predicated region
    $region18: #{position_embs.1} parent=1 // pred_check
      _
    $region19: #{position_embs.1} parent=1 // pred_check_branch
      %46 = sbr.rel (0) target = $region21
    $region20: #{position_embs.1} parent=1 // pred_region
      %s48 = ssub.s32 256, 256
      %49 = vsyncadd [#allocation4], %s48
      %s50 = sshll.u32 [#allocation7], 4
      %s51 = int_to_ptr.vmem [resolvable:$true] %s50
      %56 = dma.vmem_to_hbm [thread:$0]  %s51, 256, %s2, [#allocation4], 128, 128, 8
    $region21: #{position_embs.1} parent=1 // pred_fallthru
      _
    // Predicated region
    $region22: #{position_embs.1} parent=1 // pred_check
      _
    $region23: #{position_embs.1} parent=1 // pred_check_branch
      %58 = sbr.rel (0) target = $region25
    $region24: #{position_embs.1} parent=1 // pred_region
      %59 = dma.done [#allocation4], 256
    $region25: #{position_embs.1} parent=1 // pred_fallthru
      _
    %60 = vsyncpa [#allocation3], 1
    %61 = vsyncpa [#allocation6], 1
    %62 = vsyncpa [#allocation4], 1

</llo_original>
